<compile_context>
chip_gen: v6e
topology: v6e:2x2x1
jax: 0.10.0
libtpu: 0.0.40
codegen_flags: <defaults>
</compile_context>

<pallas_src>
import math

import jax
import jax.numpy as jnp
from jax import lax
from jax.experimental import pallas as pl
from jax.experimental.pallas import tpu as pltpu


def _make_kernel(tr, W, PC, eps):
    def kernel(x_ref, w_ref, a_ref, g_ref, b_ref, o_ref):
        # x_ref: (tr*W, C)       input rows (compute dtype, possibly bf16)
        # w_ref: (1, C, PC)      weight column-slice for this p1 (compute dtype)
        # a_ref: (PC, PC)        block-diagonal averaging matrix (1/C blocks), f32
        # g_ref, b_ref: (1, PC)  gamma/beta tiled P times (over p2), f32
        # o_ref: (tr, 1, W, PC)  output slab for this (row-tile, p1)
        xb = x_ref[...]                                             # (M, C)
        w = w_ref[0]                                                # (C, PC)
        # MXU matmul, f32 accumulation regardless of input dtype.
        y = jnp.dot(xb, w, preferred_element_type=jnp.float32)      # (M, PC)
        a = a_ref[...]
        # Per-C-segment mean/var, broadcast across the segment, via the MXU.
        # (default precision: passed 1e-4 vs f32 reference; set precision=HIGHEST
        #  here if tighter LayerNorm stats are ever required.)
        mean = jnp.dot(y, a, preferred_element_type=jnp.float32)    # (M, PC)
        d = y - mean
        var = jnp.dot(d * d, a, preferred_element_type=jnp.float32)
        out = d * lax.rsqrt(var + eps) * g_ref[...] + b_ref[...]
        # Layout-preserving when W % 8 == 0 (guarded in the wrapper's tiling).
        o_ref[...] = out.reshape(tr, 1, W, PC).astype(o_ref.dtype)

    return kernel


def _vmem_budget_bytes():
    """Generation-aware total budget for the pipelined (double-buffered) blocks."""
    try:
        cap = int(pltpu.get_tpu_info().vmem_capacity_bytes)
    except Exception:
        cap = 64 << 20  # conservative: v7x per-core physical VMEM
    # Leave ample headroom for Mosaic internal scratch / untiled operands.
    return max(8 << 20, min(24 << 20, cap // 3))


def prepare_weights(weight, gamma, beta, *, patch_size=4, compute_dtype=jnp.bfloat16):
    """Hoistable / cacheable pre-layout of the expansion weight + norm params.

    weight: (P*P*C, C) in PyTorch nn.Linear layout; gamma/beta: (C,).
    Returns (wt3, avg, gamma_tiled, beta_tiled).
    """
    PPC, C = weight.shape
    P = patch_size
    PC = P * C
    assert PPC == P * P * C, "weight shape inconsistent with patch_size/dim"
    comp_dt = jnp.dtype(compute_dtype) if compute_dtype is not None else weight.dtype
    # weight[o, c_in] with o = p1*(P*C) + p2*C + c_out  ->  (P1, C_in, P2*C_out)
    wt3 = weight.T.reshape(C, P, PC).transpose(1, 0, 2).astype(comp_dt)   # (P, C, PC)
    seg = jnp.arange(PC, dtype=jnp.int32) // C
    avg = (seg[:, None] == seg[None, :]).astype(jnp.float32) / float(C)   # (PC, PC)
    g_t = jnp.tile(gamma.astype(jnp.float32), P).reshape(1, PC)
    b_t = jnp.tile(beta.astype(jnp.float32), P).reshape(1, PC)
    return wt3, avg, g_t, b_t


def final_patch_expanding(x, weight=None, gamma=None, beta=None, *, patch_size=4,
                          eps=1e-5, compute_dtype=jnp.bfloat16, out_dtype=None,
                          prepared=None):
    """x: (B, H, W, C); weight: (P*P*C, C) (PyTorch Linear layout); gamma/beta: (C,).
    Returns (B, H*P, W*P, C).  `prepared` may be the cached result of
    prepare_weights() to skip the per-call weight re-layout."""
    B, H, W, C = x.shape
    P = patch_size
    PC = P * C
    PPC = P * P * C
    N = B * H

    if prepared is None:
        prepared = prepare_weights(weight, gamma, beta, patch_size=P,
                                   compute_dtype=compute_dtype)
    wt3, avg, g_t, b_t = prepared
    comp_dt = wt3.dtype
    out_dt = jnp.dtype(out_dtype) if out_dtype is not None else x.dtype
    o_isz = jnp.dtype(out_dt).itemsize
    c_isz = jnp.dtype(comp_dt).itemsize

    # ---- Row-tile selection ------------------------------------------------
    # Resident VMEM ~= 2*out_block + 2*x_block + 2*w_slice + A + gamma/beta.
    budget = _vmem_budget_bytes()
    per_row = 2 * (W * PC * o_isz + W * C * c_isz)          # double-buffered, per x-row
    fixed = 2 * C * PC * c_isz + PC * PC * 4 + 4 * PC * 4 + (1 << 16)
    tr_cap = max(1, (budget - fixed) // per_row)
    num_tiles = max(1, pl.cdiv(N, tr_cap))
    if N >= 2:
        num_tiles = max(num_tiles, 2)       # keep both v7x TensorCores busy
        num_tiles += num_tiles % 2          # even split across the two cores
        num_tiles = min(num_tiles, N)
    tr = pl.cdiv(N, num_tiles)
    # Keep the (tr*W, C) x block sublane-aligned (the (8,128) rule) for general W.
    req = 8 // math.gcd(W, 8)
    tr = pl.cdiv(tr, req) * req
    if tr >= N:
        tr = N                              # full-extent block is always legal
    grid0 = pl.cdiv(N, tr)                  # cdiv grid: Pallas masks the tail block

    # ---- Inputs laid out for the kernel -------------------------------------
    x2 = x.reshape(N * W, C).astype(comp_dt)   # metadata reshape + (optional) bf16 cast

    # ---- VMEM limit (v5e scoped default is only 16 MiB) ---------------------
    need = (2 * tr * W * PC * o_isz + 2 * tr * W * C * c_isz
            + 2 * C * PC * c_isz + PC * PC * 4 + 4 * PC * 4)
    vmem_limit = int(min(max(int(need * 1.25) + (4 << 20), 16 << 20), 48 << 20))

    M_total = N * W
    cost = pl.CostEstimate(
        flops=int(2 * M_total * C * PPC + 4 * M_total * P * PC * PC),
        transcendentals=int(M_total * P * P * C),
        bytes_accessed=int(M_total * C * c_isz              # x (reused across p1)
                           + grid0 * P * C * PC * c_isz     # weight slices
                           + PC * PC * 4 + 2 * PC * 4       # A, gamma, beta
                           + M_total * P * PC * o_isz),     # output write (dominant)
    )

    out4 = pl.pallas_call(
        _make_kernel(tr, W, PC, eps),
        out_shape=jax.ShapeDtypeStruct((N, P, W, PC), out_dt),
        grid_spec=pltpu.PrefetchScalarGridSpec(
            num_scalar_prefetch=0,
            grid=(grid0, P),
            in_specs=[
                pl.BlockSpec((tr * W, C), lambda i, p1: (i, 0)),     # x rows (p1-invariant)
                pl.BlockSpec((1, C, PC), lambda i, p1: (p1, 0, 0)),  # weight slice for p1
                pl.BlockSpec((PC, PC), lambda i, p1: (0, 0)),        # averaging matrix
                pl.BlockSpec((1, PC), lambda i, p1: (0, 0)),         # gamma (tiled over p2)
                pl.BlockSpec((1, PC), lambda i, p1: (0, 0)),         # beta  (tiled over p2)
            ],
            out_specs=pl.BlockSpec((tr, 1, W, PC), lambda i, p1: (i, p1, 0, 0)),
        ),
        compiler_params=pltpu.CompilerParams(
            dimension_semantics=("parallel", "arbitrary"),
            vmem_limit_bytes=vmem_limit),
        cost_estimate=cost,
    )(x2, wt3, avg, g_t, b_t)

    # (B*H, P1, W, P2*C) -> (B, H*P, W*P, C): pure metadata reshape.
    return out4.reshape(B, H * P, W * P, C)


def _reference(x, weight, gamma, beta, patch_size=4, eps=1e-5):
    B, H, W, C = x.shape
    P = patch_size
    y = jnp.einsum("bhwc,oc->bhwo", x, weight)            # Linear, no bias
    y = y.reshape(B, H, W, P, P, C)
    y = y.transpose(0, 1, 3, 2, 4, 5).reshape(B, H * P, W * P, C)
    mean = jnp.mean(y, axis=-1, keepdims=True)
    var = jnp.mean((y - mean) ** 2, axis=-1, keepdims=True)
    return (y - mean) / jnp.sqrt(var + eps) * gamma + beta


if __name__ == "__main__":
    key = jax.random.PRNGKey(0)
    B, H, W, dim, P = 2, 8, 8, 32, 4

    k1, k2, k3, k4 = jax.random.split(key, 4)
    x = jax.random.normal(k1, (B, H, W, dim), dtype=jnp.float32)
    # nn.Linear(dim, P*P*dim, bias=False) weight shape: (P*P*dim, dim)
    weight = jax.random.normal(k2, (P * P * dim, dim), dtype=jnp.float32) * 0.05
    # nn.LayerNorm(dim) affine params (deterministic, non-trivial)
    gamma = 1.0 + 0.1 * jax.random.normal(k3, (dim,), dtype=jnp.float32)
    beta = 0.1 * jax.random.normal(k4, (dim,), dtype=jnp.float32)

    ref = _reference(x, weight, gamma, beta, patch_size=P)

    # 1) Exact path (f32 MXU inputs): tight semantic check vs. the reference.
    out_exact = final_patch_expanding(x, weight, gamma, beta, patch_size=P,
                                      compute_dtype=jnp.float32)
    out_exact = jax.block_until_ready(out_exact)
    assert out_exact.shape == (B, H * P, W * P, dim)
    assert jnp.allclose(out_exact, ref, atol=1e-4, rtol=1e-4)

    # 2) Default fast path: bf16 matmul inputs, f32 accumulation / LayerNorm /
    #    f32 output; weight layout prepared once and cached (hoisted pre-layout).
    prep = prepare_weights(weight, gamma, beta, patch_size=P,
                           compute_dtype=jnp.bfloat16)
    out_fast = final_patch_expanding(x, patch_size=P, prepared=prep)
    out_fast = jax.block_until_ready(out_fast)
    assert out_fast.shape == (B, H * P, W * P, dim)
    assert jnp.allclose(out_fast, ref, atol=3e-2, rtol=3e-2)

    print("KERNEL_OK")
</pallas_src>

<mosaic_0001>
module attributes {stable_mosaic.version = 11 : i64} {
  func.func @kernel(%arg0: i32, %arg1: i32, %arg2: memref<64x32xf32, #tpu.memory_space<vmem>>, %arg3: memref<1x32x128xf32, #tpu.memory_space<vmem>>, %arg4: memref<128x128xf32, #tpu.memory_space<vmem>>, %arg5: memref<1x128xf32, #tpu.memory_space<vmem>>, %arg6: memref<1x128xf32, #tpu.memory_space<vmem>>, %arg7: memref<8x1x8x128xf32, #tpu.memory_space<vmem>>) attributes {dimension_semantics = [#tpu.dimension_semantics<parallel>, #tpu.dimension_semantics<arbitrary>], iteration_bounds = array<i64: 2, 4>, scalar_prefetch = 0 : i64, scratch_operands = 0 : i64, tpu.core_type = #tpu.core_type<tc>, window_params = [{transform_indices = @transform_0, window_bounds = array<i64: 64, 32>}, {transform_indices = @transform_1, window_bounds = array<i64: 1, 32, 128>}, {pipeline_mode = #tpu.pipeline_mode<synchronous>, transform_indices = @transform_2, window_bounds = array<i64: 128, 128>}, {pipeline_mode = #tpu.pipeline_mode<synchronous>, transform_indices = @transform_3, window_bounds = array<i64: 1, 128>}, {pipeline_mode = #tpu.pipeline_mode<synchronous>, transform_indices = @transform_4, window_bounds = array<i64: 1, 128>}, {transform_indices = @transform_5, window_bounds = array<i64: 8, 1, 8, 128>}]} {
    %c0 = arith.constant 0 : index
    %c0_0 = arith.constant 0 : index
    %0 = vector.load %arg2[%c0, %c0_0] : memref<64x32xf32, #tpu.memory_space<vmem>>, vector<64x32xf32>
    %c0_1 = arith.constant 0 : index
    %c0_2 = arith.constant 0 : index
    %c0_3 = arith.constant 0 : index
    %1 = vector.load %arg3[%c0_1, %c0_2, %c0_3] : memref<1x32x128xf32, #tpu.memory_space<vmem>>, vector<1x32x128xf32>
    %2 = vector.shape_cast %1 : vector<1x32x128xf32> to vector<32x128xf32>
    %cst = arith.constant dense<0.000000e+00> : vector<64x128xf32>
    %3 = tpu.matmul %0, %2, %cst {dimension_numbers = #tpu.dot_dimension_numbers<[1], [0], [0], [1], [0, 0, 1, 1], [], []>} : vector<64x32xf32>, vector<32x128xf32>, vector<64x128xf32> -> vector<64x128xf32>
    %c0_4 = arith.constant 0 : index
    %c0_5 = arith.constant 0 : index
    %4 = vector.load %arg4[%c0_4, %c0_5] : memref<128x128xf32, #tpu.memory_space<vmem>>, vector<128x128xf32>
    %cst_6 = arith.constant dense<0.000000e+00> : vector<64x128xf32>
    %5 = tpu.matmul %3, %4, %cst_6 {dimension_numbers = #tpu.dot_dimension_numbers<[1], [0], [0], [1], [0, 0, 1, 1], [], []>} : vector<64x128xf32>, vector<128x128xf32>, vector<64x128xf32> -> vector<64x128xf32>
    %6 = arith.subf %3, %5 : vector<64x128xf32>
    %7 = arith.mulf %6, %6 : vector<64x128xf32>
    %cst_7 = arith.constant dense<0.000000e+00> : vector<64x128xf32>
    %8 = tpu.matmul %7, %4, %cst_7 {dimension_numbers = #tpu.dot_dimension_numbers<[1], [0], [0], [1], [0, 0, 1, 1], [], []>} : vector<64x128xf32>, vector<128x128xf32>, vector<64x128xf32> -> vector<64x128xf32>
    %cst_8 = arith.constant 9.99999974E-6 : f32
    %9 = vector.broadcast %cst_8 : f32 to vector<64x128xf32>
    %10 = arith.addf %8, %9 : vector<64x128xf32>
    %11 = math.rsqrt %10 : vector<64x128xf32>
    %12 = arith.mulf %6, %11 : vector<64x128xf32>
    %c0_9 = arith.constant 0 : index
    %c0_10 = arith.constant 0 : index
    %13 = vector.load %arg5[%c0_9, %c0_10] : memref<1x128xf32, #tpu.memory_space<vmem>>, vector<1x128xf32>
    %14 = vector.broadcast %13 : vector<1x128xf32> to vector<64x128xf32>
    %15 = arith.mulf %12, %14 : vector<64x128xf32>
    %c0_11 = arith.constant 0 : index
    %c0_12 = arith.constant 0 : index
    %16 = vector.load %arg6[%c0_11, %c0_12] : memref<1x128xf32, #tpu.memory_space<vmem>>, vector<1x128xf32>
    %17 = vector.broadcast %16 : vector<1x128xf32> to vector<64x128xf32>
    %18 = arith.addf %15, %17 : vector<64x128xf32>
    %19 = vector.shape_cast %18 : vector<64x128xf32> to vector<8x1x8x128xf32>
    %c0_13 = arith.constant 0 : index
    %c0_14 = arith.constant 0 : index
    %c0_15 = arith.constant 0 : index
    %c0_16 = arith.constant 0 : index
    %20 = vector.load %arg7[%c0_13, %c0_14, %c0_15, %c0_16] : memref<8x1x8x128xf32, #tpu.memory_space<vmem>>, vector<8x1x8x128xf32>
    tpu.vector_store %arg7[%c0_13, %c0_14, %c0_15, %c0_16], %19 {strides = array<i32>} : memref<8x1x8x128xf32, #tpu.memory_space<vmem>>, vector<8x1x8x128xf32>,
    return
  }
  func.func @transform_0(%arg0: i32, %arg1: i32) -> (i32, i32) {
    %c0_i32 = arith.constant 0 : i32
    %c0_i32_0 = arith.constant 0 : i32
    return %arg0, %c0_i32 : i32, i32
  }
  func.func @transform_1(%arg0: i32, %arg1: i32) -> (i32, i32, i32) {
    %c0_i32 = arith.constant 0 : i32
    %c0_i32_0 = arith.constant 0 : i32
    %c0_i32_1 = arith.constant 0 : i32
    return %arg1, %c0_i32, %c0_i32_0 : i32, i32, i32
  }
  func.func @transform_2(%arg0: i32, %arg1: i32) -> (i32, i32) {
    %c0_i32 = arith.constant 0 : i32
    %c0_i32_0 = arith.constant 0 : i32
    %c0_i32_1 = arith.constant 0 : i32
    return %c0_i32, %c0_i32_0 : i32, i32
  }
  func.func @transform_3(%arg0: i32, %arg1: i32) -> (i32, i32) {
    %c0_i32 = arith.constant 0 : i32
    %c0_i32_0 = arith.constant 0 : i32
    %c0_i32_1 = arith.constant 0 : i32
    return %c0_i32, %c0_i32_0 : i32, i32
  }
  func.func @transform_4(%arg0: i32, %arg1: i32) -> (i32, i32) {
    %c0_i32 = arith.constant 0 : i32
    %c0_i32_0 = arith.constant 0 : i32
    %c0_i32_1 = arith.constant 0 : i32
    return %c0_i32, %c0_i32_0 : i32, i32
  }
  func.func @transform_5(%arg0: i32, %arg1: i32) -> (i32, i32, i32, i32) {
    %c0_i32 = arith.constant 0 : i32
    %c0_i32_0 = arith.constant 0 : i32
    %c0_i32_1 = arith.constant 0 : i32
    return %arg0, %arg1, %c0_i32, %c0_i32_0 : i32, i32, i32, i32
  }
}

</mosaic_0001>

<llo_original>
// kernel: tpu_custom_call.1
$region0: #{tpu_custom_call.1}
  #allocation0 [shape = 'u32[]', space=smem, size = 0x4, offset = 0x4, fixed_abs, tag = 'smem constant byte address 0x4 - core index']
  #allocation1 [shape = 'u32[144,128]{1,0:T(1,128)}', space=vmem, size = 0x12000, scoped, tag = 'internal scratch']
  %s0 = inlined_call_operand.vmem [shape: f32[128,32], index: 0, kind: input, shape index: {}]
  %s1 = inlined_call_operand.vmem [shape: f32[4,32,128], index: 1, kind: input, shape index: {}]
  %s2 = inlined_call_operand.hbm [shape: f32[128,128], index: 2, kind: input, shape index: {}]
  %s3 = inlined_call_operand.vmem [shape: f32[1,128], index: 3, kind: input, shape index: {}]
  %s4 = inlined_call_operand.vmem [shape: f32[1,128], index: 4, kind: input, shape index: {}]
  %s5 = inlined_call_operand.hbm [shape: f32[16,4,8,128], index: 5, kind: output, shape index: {}]
  %s6 = sld [smem:[#allocation0]]
  $region57: #{tpu_custom_call.1} parent=0
    _
  %s8 = ssub.s32 1, %s6
  %s9 = scalar_select 0, %s8, %s6
  $region1: #{tpu_custom_call.1} parent=0
    #allocation2 [shape = 'u8[65536]{0}', space=vmem, size = 0x10000, scoped, tag = 'input window, operand 2, single buffered']
    #allocation3 [shape = 's32[2]{0}', space=sflag, size = 0x8, scoped, tag = 'scoped memory for tpu_custom_call.1']
    #allocation4 [shape = 's32[2]{0}', space=sflag, size = 0x8, scoped, tag = 'scoped memory for tpu_custom_call.1']
    #allocation5 [shape = 'u8[65536]{0}', space=vmem, size = 0x10000, scoped, tag = 'output window, operand 0']
    %10 = vsyncpa [#allocation3], 0
    %11 = vsyncpa [#allocation4], 0
    %s12 = scalar_lea.sflag [#allocation4], 1
    %13 = vsyncpa %s12, 0
    loop: start=0, step=1, limit=10
    $region2: #{tpu_custom_call.1} parent=1 // loop_pre_header
      _
    $region3: #{tpu_custom_call.1} parent=1 // loop_header
      %s15 = sphi 0, %s19
      %p16 = scmp.ge.s32.totalorder %s15, 10
      %s22 = sphi 0, %s34
      %s23 = sphi 0, %s30
      %s24 = sphi 0, %s22
      %s25 = sphi 0, %s23
      %s26 = sphi 0, %s24
      %s27 = sphi 0, %s25
      %s37 = sphi 0, %s39
      %s40 = sphi 0, %s37
      %s41 = sphi 0, %s40
      %s57 = sphi 0, %s41
      %s63 = sphi 0, %s65
      %s66 = sphi 0, %s63
      %s67 = sphi 0, %s66
      %s83 = sphi 0, %s67
      %s87 = sphi 0, %s87
      %s89 = sphi 0, %s87
      %s90 = sphi 0, %s89
      %s104 = sphi 0, %s90
      %s108 = sphi 0, %s108
      %s110 = sphi 0, %s108
      %s111 = sphi 0, %s110
      %s125 = sphi 0, %s111
      %s129 = sphi 0, %s129
      %s131 = sphi 0, %s129
      %s132 = sphi 0, %s131
      %s146 = sphi 0, %s132
      %s154 = sphi 0, %s156
      %s157 = sphi 0, %s154
      %s158 = sphi 0, %s157
      %s174 = sphi 0, %s158
    $region4: #{tpu_custom_call.1} parent=1 // loop_header_branch
      %18 = sbr.rel (%p16) target = $region8
    $region5: #{tpu_custom_call.1} parent=1 // loop_body
      %s20 = ssub.s32 %s15, 1
      %s21 = ssub.s32 %s15, 2
      %s28 = sadd.s32 1, %s23
      %p29 = scmp.ge.s32.totalorder %s28, 4
      %s30 = scalar_select %p29, 0, %s28
      %s31 = sadd.s32 1, %s22
      %s32 = scalar_select %p29, %s31, %s22
      %p33 = scmp.ge.s32.totalorder %s32, 2
      %s34 = scalar_select %p33, 0, %s32
      %s35 = ssub.s32 %s22, %s34
      %p36 = scmp.eq.s32.totalorder %s35, 0
      %s38 = sadd.s32 %s37, 1
      %s39 = scalar_select %p36, %s37, %s38
      %p42 = pneg %p36
      %p43 = scmp.eq.s32.totalorder %s15, 7
      %p44 = por %p42, %p43
      %p45 = scmp.ne.s32.totalorder %s37, %s40
      %p46 = scmp.eq.s32.totalorder %s15, 0
      %p47 = por %p45, %p46
      %p48 = scmp.ne.s32.totalorder %s37, %s40
      %p49 = scmp.eq.s32.totalorder %s20, 7
      %p50 = por %p48, %p49
      %p51 = scmp.ne.s32.totalorder %s40, %s41
      %p52 = scmp.eq.s32.totalorder %s20, 0
      %p53 = por %p51, %p52
      %p54 = scmp.ne.s32.totalorder %s40, %s41
      %p55 = scmp.eq.s32.totalorder %s21, 7
      %p56 = por %p54, %p55
      %p58 = scmp.ne.s32.totalorder %s41, %s57
      %p59 = scmp.eq.s32.totalorder %s21, 0
      %p60 = por %p58, %p59
      %s61 = ssub.s32 %s23, %s30
      %p62 = scmp.eq.s32.totalorder %s61, 0
      %s64 = sadd.s32 %s63, 1
      %s65 = scalar_select %p62, %s63, %s64
      %p68 = pneg %p62
      %p69 = scmp.eq.s32.totalorder %s15, 7
      %p70 = por %p68, %p69
      %p71 = scmp.ne.s32.totalorder %s63, %s66
      %p72 = scmp.eq.s32.totalorder %s15, 0
      %p73 = por %p71, %p72
      %p74 = scmp.ne.s32.totalorder %s63, %s66
      %p75 = scmp.eq.s32.totalorder %s20, 7
      %p76 = por %p74, %p75
      %p77 = scmp.ne.s32.totalorder %s66, %s67
      %p78 = scmp.eq.s32.totalorder %s20, 0
      %p79 = por %p77, %p78
      %p80 = scmp.ne.s32.totalorder %s66, %s67
      %p81 = scmp.eq.s32.totalorder %s21, 7
      %p82 = por %p80, %p81
      %p84 = scmp.ne.s32.totalorder %s67, %s83
      %p85 = scmp.eq.s32.totalorder %s21, 0
      %p86 = por %p84, %p85
      %s88 = sadd.s32 %s87, 1
      %p91 = scmp.eq.s32.totalorder %s15, 7
      %p92 = scmp.ne.s32.totalorder %s87, %s89
      %p93 = scmp.eq.s32.totalorder %s15, 0
      %p94 = por %p92, %p93
      %p95 = scmp.ne.s32.totalorder %s87, %s89
      %p96 = scmp.eq.s32.totalorder %s20, 7
      %p97 = por %p95, %p96
      %p98 = scmp.ne.s32.totalorder %s89, %s90
      %p99 = scmp.eq.s32.totalorder %s20, 0
      %p100 = por %p98, %p99
      %p101 = scmp.ne.s32.totalorder %s89, %s90
      %p102 = scmp.eq.s32.totalorder %s21, 7
      %p103 = por %p101, %p102
      %p105 = scmp.ne.s32.totalorder %s90, %s104
      %p106 = scmp.eq.s32.totalorder %s21, 0
      %p107 = por %p105, %p106
      %s109 = sadd.s32 %s108, 1
      %p112 = scmp.eq.s32.totalorder %s15, 7
      %p113 = scmp.ne.s32.totalorder %s108, %s110
      %p114 = scmp.eq.s32.totalorder %s15, 0
      %p115 = por %p113, %p114
      %p116 = scmp.ne.s32.totalorder %s108, %s110
      %p117 = scmp.eq.s32.totalorder %s20, 7
      %p118 = por %p116, %p117
      %p119 = scmp.ne.s32.totalorder %s110, %s111
      %p120 = scmp.eq.s32.totalorder %s20, 0
      %p121 = por %p119, %p120
      %p122 = scmp.ne.s32.totalorder %s110, %s111
      %p123 = scmp.eq.s32.totalorder %s21, 7
      %p124 = por %p122, %p123
      %p126 = scmp.ne.s32.totalorder %s111, %s125
      %p127 = scmp.eq.s32.totalorder %s21, 0
      %p128 = por %p126, %p127
      %s130 = sadd.s32 %s129, 1
      %p133 = scmp.eq.s32.totalorder %s15, 7
      %p134 = scmp.ne.s32.totalorder %s129, %s131
      %p135 = scmp.eq.s32.totalorder %s15, 0
      %p136 = por %p134, %p135
      %p137 = scmp.ne.s32.totalorder %s129, %s131
      %p138 = scmp.eq.s32.totalorder %s20, 7
      %p139 = por %p137, %p138
      %p140 = scmp.ne.s32.totalorder %s131, %s132
      %p141 = scmp.eq.s32.totalorder %s20, 0
      %p142 = por %p140, %p141
      %p143 = scmp.ne.s32.totalorder %s131, %s132
      %p144 = scmp.eq.s32.totalorder %s21, 7
      %p145 = por %p143, %p144
      %p147 = scmp.ne.s32.totalorder %s132, %s146
      %p148 = scmp.eq.s32.totalorder %s21, 0
      %p149 = por %p147, %p148
      %s150 = ssub.s32 %s22, %s34
      %s151 = ssub.s32 %s23, %s30
      %s152 = sor.u32 %s150, %s151
      %p153 = scmp.eq.s32.totalorder %s152, 0
      %s155 = sadd.s32 %s154, 1
      %s156 = scalar_select %p153, %s154, %s155
      %p159 = pneg %p153
      %p160 = scmp.eq.s32.totalorder %s15, 7
      %p161 = por %p159, %p160
      %p162 = scmp.ne.s32.totalorder %s154, %s157
      %p163 = scmp.eq.s32.totalorder %s15, 0
      %p164 = por %p162, %p163
      %p165 = scmp.ne.s32.totalorder %s154, %s157
      %p166 = scmp.eq.s32.totalorder %s20, 7
      %p167 = por %p165, %p166
      %p168 = scmp.ne.s32.totalorder %s157, %s158
      %p169 = scmp.eq.s32.totalorder %s20, 0
      %p170 = por %p168, %p169
      %p171 = scmp.ne.s32.totalorder %s157, %s158
      %p172 = scmp.eq.s32.totalorder %s21, 7
      %p173 = por %p171, %p172
      %p175 = scmp.ne.s32.totalorder %s158, %s174
      %p176 = scmp.eq.s32.totalorder %s21, 0
      %p177 = por %p175, %p176
      %p178 = scmp.le.s32.totalorder 1, %s15
      %p179 = scmp.lt.s32.totalorder %s15, 9
      %p180 = pnand %p178, %p179
      %p181 = pneg %p180
      // Predicated region
      $region9: #{tpu_custom_call.1} parent=5 // pred_check
        _
      $region10: #{tpu_custom_call.1} parent=5 // pred_check_branch
        %183 = sbr.rel (%p180) target = $region12
      $region11: #{tpu_custom_call.1} parent=5 // pred_region
        %s184 = ssub.s32 %s15, 1
        // Predicated region
        $region13: #{tpu_custom_call.1} parent=11 // pred_check
          %p185 = pneg %p100
        $region14: #{tpu_custom_call.1} parent=11 // pred_check_branch
          %187 = sbr.rel (%p185) target = $region16
        $region15: #{tpu_custom_call.1} parent=11 // pred_region
          %s189 = ssub.s32 2048, 2048
          %190 = vsyncadd [#allocation3], %s189
          %s191 = sshll.u32 [#allocation2], 4
          %s192 = int_to_ptr.vmem [resolvable:$true] %s191
          %197 = dma.hbm_to_vmem [thread:$0]  %s2, 2048, %s192, [#allocation3], 128, 128, 8
        $region16: #{tpu_custom_call.1} parent=11 // pred_fallthru
          _
        // Predicated region
        $region17: #{tpu_custom_call.1} parent=11 // pred_check
          %p198 = pneg %p121
        $region18: #{tpu_custom_call.1} parent=11 // pred_check_branch
          %200 = sbr.rel (%p198) target = $region20
        $region19: #{tpu_custom_call.1} parent=11 // pred_region
          _
        $region20: #{tpu_custom_call.1} parent=11 // pred_fallthru
          _
        // Predicated region
        $region21: #{tpu_custom_call.1} parent=11 // pred_check
          %p201 = pneg %p142
        $region22: #{tpu_custom_call.1} parent=11 // pred_check_branch
          %203 = sbr.rel (%p201) target = $region24
        $region23: #{tpu_custom_call.1} parent=11 // pred_region
          _
        $region24: #{tpu_custom_call.1} parent=11 // pred_fallthru
          _
      $region12: #{tpu_custom_call.1} parent=5 // pred_fallthru
        _
      %p204 = scmp.lt.s32.totalorder %s15, 8
      // Predicated region
      $region25: #{tpu_custom_call.1} parent=5 // pred_check
        %p205 = pneg %p204
      $region26: #{tpu_custom_call.1} parent=5 // pred_check_branch
        %207 = sbr.rel (%p205) target = $region28
      $region27: #{tpu_custom_call.1} parent=5 // pred_region
        // Predicated region
        $region29: #{tpu_custom_call.1} parent=27 // pred_check
          %p208 = pneg %p47
        $region30: #{tpu_custom_call.1} parent=27 // pred_check_branch
          %210 = sbr.rel (%p208) target = $region32
        $region31: #{tpu_custom_call.1} parent=27 // pred_region
          %s211 = smul.u32 8, %s22
          %p212 = scmp.lt.s32.totalorder %s211, 15
          %s213 = scalar_select %p212, %s211, 15
          %s214 = smul.addr %s213, 8
          %s215 = scalar_lea.vmem %s0, %s214
          %s216 = smul.u32 8, %s22
        $region32: #{tpu_custom_call.1} parent=27 // pred_fallthru
          _
        // Predicated region
        $region33: #{tpu_custom_call.1} parent=27 // pred_check
          %p217 = pneg %p73
        $region34: #{tpu_custom_call.1} parent=27 // pred_check_branch
          %219 = sbr.rel (%p217) target = $region36
        $region35: #{tpu_custom_call.1} parent=27 // pred_region
          %p220 = scmp.lt.s32.totalorder %s23, 3
          %s221 = scalar_select %p220, %s23, 3
          %s222 = smul.addr %s221, 4
          %s223 = smul.addr %s222, 8
          %s224 = scalar_lea.vmem %s1, %s223
        $region36: #{tpu_custom_call.1} parent=27 // pred_fallthru
          _
      $region28: #{tpu_custom_call.1} parent=5 // pred_fallthru
        _
      %p225 = scmp.le.s32.totalorder 1, %s15
      %p226 = scmp.lt.s32.totalorder %s15, 9
      %p227 = pnand %p225, %p226
      %p228 = pneg %p227
      // Predicated region
      $region37: #{tpu_custom_call.1} parent=5 // pred_check
        _
      $region38: #{tpu_custom_call.1} parent=5 // pred_check_branch
        %230 = sbr.rel (%p227) target = $region40
      $region39: #{tpu_custom_call.1} parent=5 // pred_region
        %s231 = ssub.s32 %s15, 1
        // Predicated region
        $region41: #{tpu_custom_call.1} parent=39 // pred_check
          %p232 = pneg %p100
        $region42: #{tpu_custom_call.1} parent=39 // pred_check_branch
          %234 = sbr.rel (%p232) target = $region44
        $region43: #{tpu_custom_call.1} parent=39 // pred_region
          %235 = dma.done [#allocation3], 2048
        $region44: #{tpu_custom_call.1} parent=39 // pred_fallthru
          _
        %s236 = smul.u32 8, %s24
        %p237 = scmp.lt.s32.totalorder %s236, 15
        %s238 = scalar_select %p237, %s236, 15
        %s239 = smul.addr %s238, 8
        %s240 = scalar_lea.vmem %s0, %s239
        %p241 = pneg %p53
        %p242 = pneg %p50
        %p243 = scmp.lt.s32.totalorder %s25, 3
        %s244 = scalar_select %p243, %s25, 3
        %s245 = smul.addr %s244, 4
        %s246 = smul.addr %s245, 8
        %s247 = scalar_lea.vmem %s1, %s246
        %p248 = pneg %p79
        %p249 = pneg %p76
        %p250 = pneg %p100
        %p251 = pneg %p97
        %p252 = pneg %p121
        %p253 = pneg %p118
        %p254 = pneg %p142
        %p255 = pneg %p139
        %p256 = pneg %p170
        %p257 = pneg %p167
        %s258 = sand.u32 %s157, 1
        %s259 = scalar_lea.sflag [#allocation4], %s258
        %s260 = sand.u32 %s157, 1
        %s261 = smul.addr %s260, 64
        %s262 = scalar_lea.vmem [#allocation5], %s261
        %s263 = smul.u32 8, %s24
        %p264 = scmp.lt.s32.totalorder %s263, 15
        %s265 = scalar_select %p264, %s263, 15
        %s266 = smul.addr %s265, 8
        %s267 = scalar_lea.vmem %s0, %s266
        %s268 = smul.u32 8, %s24
        %p269 = scmp.lt.s32.totalorder %s25, 3
        %s270 = scalar_select %p269, %s25, 3
        %s271 = smul.addr %s270, 4
        %s272 = smul.addr %s271, 8
        %s273 = scalar_lea.vmem %s1, %s272
        %s274 = smul.u32 8, %s24
        %v275 = vld [vmem:[%s267] sm:$0xff]
        %v276 = vld [vmem:[%s267 + $0x8] sm:$0xff]
        %v277 = vld [vmem:[%s267 + $0x10] sm:$0xff]
        %v278 = vld [vmem:[%s267 + $0x18] sm:$0xff]
        %v279 = vld [vmem:[%s267 + $0x20] sm:$0xff]
        %v280 = vld [vmem:[%s267 + $0x28] sm:$0xff]
        %v281 = vld [vmem:[%s267 + $0x30] sm:$0xff]
        %v282 = vld [vmem:[%s267 + $0x38] sm:$0xff]
        %v283 = vld [vmem:[%s273] sm:$0xff]
        %v284 = vld [vmem:[%s273 + $0x8] sm:$0xff]
        %v285 = vld [vmem:[%s273 + $0x10] sm:$0xff]
        %v286 = vld [vmem:[%s273 + $0x18] sm:$0xff]
        %vm287 = vcmask 261120
        %v289 = vsel %vm287, %v275, 0
        %v292 = vsel %vm287, %v276, 0
        %v295 = vsel %vm287, %v277, 0
        %v298 = vsel %vm287, %v278, 0
        %v301 = vsel %vm287, %v279, 0
        %v304 = vsel %vm287, %v280, 0
        %v307 = vsel %vm287, %v281, 0
        %v310 = vsel %vm287, %v282, 0
        %312 = vmatprep.subr.mxu0 0.0
        %313 = vmatpush1.msra.mxu0 0.0
        %314 = vmatprep.subr.mxu0 0.0
        %315 = vmatpush1.msra.mxu0 0.0
        %316 = vmatprep.subr.mxu0 0.0
        %317 = vmatpush1.msra.mxu0 0.0
        %318 = vmatprep.subr.mxu0 0.0
        %319 = vmatpush1.msra.mxu0 0.0
        %320 = vmatprep.subr.mxu0 0.0
        %321 = vmatpush1.msra.mxu0 0.0
        %322 = vmatprep.subr.mxu0 0.0
        %323 = vmatpush1.msra.mxu0 0.0
        %324 = vmatprep.subr.mxu0 0.0
        %325 = vmatpush1.msra.mxu0 0.0
        %326 = vmatprep.subr.mxu0 0.0
        %327 = vmatpush1.msra.mxu0 0.0
        %328 = vmatprep.subr.mxu0 0.0
        %329 = vmatpush1.msra.mxu0 0.0
        %330 = vmatprep.subr.mxu0 0.0
        %331 = vmatpush1.msra.mxu0 0.0
        %332 = vmatprep.subr.mxu0 0.0
        %333 = vmatpush1.msra.mxu0 0.0
        %334 = vmatprep.subr.mxu0 0.0
        %335 = vmatpush1.msra.mxu0 0.0
        %336 = vmatprep.subr.mxu0 0.0
        %337 = vmatpush1.msra.mxu0 %v286
        %338 = vmatprep.subr.mxu0 0.0
        %339 = vmatpush1.msra.mxu0 %v285
        %340 = vmatprep.subr.mxu0 0.0
        %341 = vmatpush1.msra.mxu0 %v284
        %342 = vmatprep.subr.mxu0 0.0
        %343 = vmatpush1.msra.mxu0 %v283
        %344 = vmatprep.subr.mxu0 0.0
        %345 = vmatpush2.msra.mxu0 0.0
        %346 = vmatprep.subr.mxu0 0.0
        %347 = vmatpush2.msra.mxu0 0.0
        %348 = vmatprep.subr.mxu0 0.0
        %349 = vmatpush2.msra.mxu0 0.0
        %350 = vmatprep.subr.mxu0 0.0
        %351 = vmatpush2.msra.mxu0 0.0
        %352 = vmatprep.subr.mxu0 0.0
        %353 = vmatpush2.msra.mxu0 0.0
        %354 = vmatprep.subr.mxu0 0.0
        %355 = vmatpush2.msra.mxu0 0.0
        %356 = vmatprep.subr.mxu0 0.0
        %357 = vmatpush2.msra.mxu0 0.0
        %358 = vmatprep.subr.mxu0 0.0
        %359 = vmatpush2.msra.mxu0 0.0
        %360 = vmatprep.subr.mxu0 0.0
        %361 = vmatpush2.msra.mxu0 0.0
        %362 = vmatprep.subr.mxu0 0.0
        %363 = vmatpush2.msra.mxu0 0.0
        %364 = vmatprep.subr.mxu0 0.0
        %365 = vmatpush2.msra.mxu0 0.0
        %366 = vmatprep.subr.mxu0 0.0
        %367 = vmatpush2.msra.mxu0 0.0
        %368 = vmatprep.subr.mxu0 0.0
        %369 = vmatpush2.msra.mxu0 0.0
        %370 = vmatprep.subr.mxu0 0.0
        %371 = vmatpush2.msra.mxu0 0.0
        %372 = vmatprep.subr.mxu0 0.0
        %373 = vmatpush2.msra.mxu0 0.0
        %374 = vmatprep.subr.mxu0 0.0
        %375 = vmatpush2.msra.mxu0 0.0
        %376 = vmatprep.mubr.f32.mxu0 0.0
        %377 = vmatmul.mubr.f32.gmra.mxu0 %v289
        %v378 = vpop.f32.mrf.mxu0
        %v379 = vadd.f32 0.0, %v378
        %v380 = vpop.f32.mrf.mxu0
        %381 = vmatprep.mubr.f32.mxu0 0.0
        %382 = vmatmul.mubr.f32.gmra.mxu0 %v292
        %v383 = vpop.f32.mrf.mxu0
        %v384 = vadd.f32 0.0, %v383
        %v385 = vpop.f32.mrf.mxu0
        %386 = vmatprep.mubr.f32.mxu0 0.0
        %387 = vmatmul.mubr.f32.gmra.mxu0 %v295
        %v388 = vpop.f32.mrf.mxu0
        %v389 = vadd.f32 0.0, %v388
        %v390 = vpop.f32.mrf.mxu0
        %391 = vmatprep.mubr.f32.mxu0 0.0
        %392 = vmatmul.mubr.f32.gmra.mxu0 %v298
        %v393 = vpop.f32.mrf.mxu0
        %v394 = vadd.f32 0.0, %v393
        %v395 = vpop.f32.mrf.mxu0
        %396 = vmatprep.mubr.f32.mxu0 0.0
        %397 = vmatmul.mubr.f32.gmra.mxu0 %v301
        %v398 = vpop.f32.mrf.mxu0
        %v399 = vadd.f32 0.0, %v398
        %v400 = vpop.f32.mrf.mxu0
        %401 = vmatprep.mubr.f32.mxu0 0.0
        %402 = vmatmul.mubr.f32.gmra.mxu0 %v304
        %v403 = vpop.f32.mrf.mxu0
        %v404 = vadd.f32 0.0, %v403
        %v405 = vpop.f32.mrf.mxu0
        %406 = vmatprep.mubr.f32.mxu0 0.0
        %407 = vmatmul.mubr.f32.gmra.mxu0 %v307
        %v408 = vpop.f32.mrf.mxu0
        %v409 = vadd.f32 0.0, %v408
        %v410 = vpop.f32.mrf.mxu0
        %411 = vmatprep.mubr.f32.mxu0 0.0
        %412 = vmatmul.mubr.f32.gmra.mxu0 %v310
        %v413 = vpop.f32.mrf.mxu0
        %v414 = vadd.f32 0.0, %v413
        %v415 = vpop.f32.mrf.mxu0
        %416 = vdwg.mxu0
        %v417 = vld [vmem:[#allocation2] sm:$0xff]
        %v418 = vld [vmem:[#allocation2 + $0x8] sm:$0xff]
        %v419 = vld [vmem:[#allocation2 + $0x10] sm:$0xff]
        %v420 = vld [vmem:[#allocation2 + $0x18] sm:$0xff]
        %v421 = vld [vmem:[#allocation2 + $0x20] sm:$0xff]
        %v422 = vld [vmem:[#allocation2 + $0x28] sm:$0xff]
        %v423 = vld [vmem:[#allocation2 + $0x30] sm:$0xff]
        %v424 = vld [vmem:[#allocation2 + $0x38] sm:$0xff]
        %v425 = vld [vmem:[#allocation2 + $0x40] sm:$0xff]
        %v426 = vld [vmem:[#allocation2 + $0x48] sm:$0xff]
        %v427 = vld [vmem:[#allocation2 + $0x50] sm:$0xff]
        %v428 = vld [vmem:[#allocation2 + $0x58] sm:$0xff]
        %v429 = vld [vmem:[#allocation2 + $0x60] sm:$0xff]
        %v430 = vld [vmem:[#allocation2 + $0x68] sm:$0xff]
        %v431 = vld [vmem:[#allocation2 + $0x70] sm:$0xff]
        %v432 = vld [vmem:[#allocation2 + $0x78] sm:$0xff]
        %433 = vmatprep.subr.mxu0 0.0
        %434 = vmatpush1.msra.mxu0 %v432
        %435 = vmatprep.subr.mxu0 0.0
        %436 = vmatpush1.msra.mxu0 %v431
        %437 = vmatprep.subr.mxu0 0.0
        %438 = vmatpush1.msra.mxu0 %v430
        %439 = vmatprep.subr.mxu0 0.0
        %440 = vmatpush1.msra.mxu0 %v429
        %441 = vmatprep.subr.mxu0 0.0
        %442 = vmatpush1.msra.mxu0 %v428
        %443 = vmatprep.subr.mxu0 0.0
        %444 = vmatpush1.msra.mxu0 %v427
        %445 = vmatprep.subr.mxu0 0.0
        %446 = vmatpush1.msra.mxu0 %v426
        %447 = vmatprep.subr.mxu0 0.0
        %448 = vmatpush1.msra.mxu0 %v425
        %449 = vmatprep.subr.mxu0 0.0
        %450 = vmatpush1.msra.mxu0 %v424
        %451 = vmatprep.subr.mxu0 0.0
        %452 = vmatpush1.msra.mxu0 %v423
        %453 = vmatprep.subr.mxu0 0.0
        %454 = vmatpush1.msra.mxu0 %v422
        %455 = vmatprep.subr.mxu0 0.0
        %456 = vmatpush1.msra.mxu0 %v421
        %457 = vmatprep.subr.mxu0 0.0
        %458 = vmatpush1.msra.mxu0 %v420
        %459 = vmatprep.subr.mxu0 0.0
        %460 = vmatpush1.msra.mxu0 %v419
        %461 = vmatprep.subr.mxu0 0.0
        %462 = vmatpush1.msra.mxu0 %v418
        %463 = vmatprep.subr.mxu0 0.0
        %464 = vmatpush1.msra.mxu0 %v417
        %465 = vmatprep.subr.mxu0 0.0
        %466 = vmatpush2.msra.mxu0 0.0
        %467 = vmatprep.subr.mxu0 0.0
        %468 = vmatpush2.msra.mxu0 0.0
        %469 = vmatprep.subr.mxu0 0.0
        %470 = vmatpush2.msra.mxu0 0.0
        %471 = vmatprep.subr.mxu0 0.0
        %472 = vmatpush2.msra.mxu0 0.0
        %473 = vmatprep.subr.mxu0 0.0
        %474 = vmatpush2.msra.mxu0 0.0
        %475 = vmatprep.subr.mxu0 0.0
        %476 = vmatpush2.msra.mxu0 0.0
        %477 = vmatprep.subr.mxu0 0.0
        %478 = vmatpush2.msra.mxu0 0.0
        %479 = vmatprep.subr.mxu0 0.0
        %480 = vmatpush2.msra.mxu0 0.0
        %481 = vmatprep.subr.mxu0 0.0
        %482 = vmatpush2.msra.mxu0 0.0
        %483 = vmatprep.subr.mxu0 0.0
        %484 = vmatpush2.msra.mxu0 0.0
        %485 = vmatprep.subr.mxu0 0.0
        %486 = vmatpush2.msra.mxu0 0.0
        %487 = vmatprep.subr.mxu0 0.0
        %488 = vmatpush2.msra.mxu0 0.0
        %489 = vmatprep.subr.mxu0 0.0
        %490 = vmatpush2.msra.mxu0 0.0
        %491 = vmatprep.subr.mxu0 0.0
        %492 = vmatpush2.msra.mxu0 0.0
        %493 = vmatprep.subr.mxu0 0.0
        %494 = vmatpush2.msra.mxu0 0.0
        %495 = vmatprep.subr.mxu0 0.0
        %496 = vmatpush2.msra.mxu0 0.0
        %497 = vmatprep.mubr.f32.mxu0 0.0
        %498 = vmatmul.mubr.f32.gmra.mxu0 %v379
        %v499 = vpop.f32.mrf.mxu0
        %v500 = vadd.f32 0.0, %v499
        %v501 = vpop.f32.mrf.mxu0
        %502 = vmatprep.mubr.f32.mxu0 0.0
        %503 = vmatmul.mubr.f32.gmra.mxu0 %v384
        %v504 = vpop.f32.mrf.mxu0
        %v505 = vadd.f32 0.0, %v504
        %v506 = vpop.f32.mrf.mxu0
        %507 = vmatprep.mubr.f32.mxu0 0.0
        %508 = vmatmul.mubr.f32.gmra.mxu0 %v389
        %v509 = vpop.f32.mrf.mxu0
        %v510 = vadd.f32 0.0, %v509
        %v511 = vpop.f32.mrf.mxu0
        %512 = vmatprep.mubr.f32.mxu0 0.0
        %513 = vmatmul.mubr.f32.gmra.mxu0 %v394
        %v514 = vpop.f32.mrf.mxu0
        %v515 = vadd.f32 0.0, %v514
        %v516 = vpop.f32.mrf.mxu0
        %517 = vmatprep.mubr.f32.mxu0 0.0
        %518 = vmatmul.mubr.f32.gmra.mxu0 %v399
        %v519 = vpop.f32.mrf.mxu0
        %v520 = vadd.f32 0.0, %v519
        %v521 = vpop.f32.mrf.mxu0
        %522 = vmatprep.mubr.f32.mxu0 0.0
        %523 = vmatmul.mubr.f32.gmra.mxu0 %v404
        %v524 = vpop.f32.mrf.mxu0
        %v525 = vadd.f32 0.0, %v524
        %v526 = vpop.f32.mrf.mxu0
        %527 = vmatprep.mubr.f32.mxu0 0.0
        %528 = vmatmul.mubr.f32.gmra.mxu0 %v409
        %v529 = vpop.f32.mrf.mxu0
        %v530 = vadd.f32 0.0, %v529
        %v531 = vpop.f32.mrf.mxu0
        %532 = vmatprep.mubr.f32.mxu0 0.0
        %533 = vmatmul.mubr.f32.gmra.mxu0 %v414
        %v534 = vpop.f32.mrf.mxu0
        %v535 = vadd.f32 0.0, %v534
        %v536 = vpop.f32.mrf.mxu0
        %537 = vdwg.mxu0
        %v538 = vsub.f32 %v379, %v500
        %v539 = vsub.f32 %v384, %v505
        %v540 = vsub.f32 %v389, %v510
        %v541 = vsub.f32 %v394, %v515
        %v542 = vsub.f32 %v399, %v520
        %v543 = vsub.f32 %v404, %v525
        %v544 = vsub.f32 %v409, %v530
        %v545 = vsub.f32 %v414, %v535
        %v546 = vmul.f32 %v538, %v538
        %v547 = vmul.f32 %v539, %v539
        %v548 = vmul.f32 %v540, %v540
        %v549 = vmul.f32 %v541, %v541
        %v550 = vmul.f32 %v542, %v542
        %v551 = vmul.f32 %v543, %v543
        %v552 = vmul.f32 %v544, %v544
        %v553 = vmul.f32 %v545, %v545
        %554 = vmatprep.subr.mxu0 0.0
        %555 = vmatpush1.msra.mxu0 %v432
        %556 = vmatprep.subr.mxu0 0.0
        %557 = vmatpush1.msra.mxu0 %v431
        %558 = vmatprep.subr.mxu0 0.0
        %559 = vmatpush1.msra.mxu0 %v430
        %560 = vmatprep.subr.mxu0 0.0
        %561 = vmatpush1.msra.mxu0 %v429
        %562 = vmatprep.subr.mxu0 0.0
        %563 = vmatpush1.msra.mxu0 %v428
        %564 = vmatprep.subr.mxu0 0.0
        %565 = vmatpush1.msra.mxu0 %v427
        %566 = vmatprep.subr.mxu0 0.0
        %567 = vmatpush1.msra.mxu0 %v426
        %568 = vmatprep.subr.mxu0 0.0
        %569 = vmatpush1.msra.mxu0 %v425
        %570 = vmatprep.subr.mxu0 0.0
        %571 = vmatpush1.msra.mxu0 %v424
        %572 = vmatprep.subr.mxu0 0.0
        %573 = vmatpush1.msra.mxu0 %v423
        %574 = vmatprep.subr.mxu0 0.0
        %575 = vmatpush1.msra.mxu0 %v422
        %576 = vmatprep.subr.mxu0 0.0
        %577 = vmatpush1.msra.mxu0 %v421
        %578 = vmatprep.subr.mxu0 0.0
        %579 = vmatpush1.msra.mxu0 %v420
        %580 = vmatprep.subr.mxu0 0.0
        %581 = vmatpush1.msra.mxu0 %v419
        %582 = vmatprep.subr.mxu0 0.0
        %583 = vmatpush1.msra.mxu0 %v418
        %584 = vmatprep.subr.mxu0 0.0
        %585 = vmatpush1.msra.mxu0 %v417
        %586 = vmatprep.subr.mxu0 0.0
        %587 = vmatpush2.msra.mxu0 0.0
        %588 = vmatprep.subr.mxu0 0.0
        %589 = vmatpush2.msra.mxu0 0.0
        %590 = vmatprep.subr.mxu0 0.0
        %591 = vmatpush2.msra.mxu0 0.0
        %592 = vmatprep.subr.mxu0 0.0
        %593 = vmatpush2.msra.mxu0 0.0
        %594 = vmatprep.subr.mxu0 0.0
        %595 = vmatpush2.msra.mxu0 0.0
        %596 = vmatprep.subr.mxu0 0.0
        %597 = vmatpush2.msra.mxu0 0.0
        %598 = vmatprep.subr.mxu0 0.0
        %599 = vmatpush2.msra.mxu0 0.0
        %600 = vmatprep.subr.mxu0 0.0
        %601 = vmatpush2.msra.mxu0 0.0
        %602 = vmatprep.subr.mxu0 0.0
        %603 = vmatpush2.msra.mxu0 0.0
        %604 = vmatprep.subr.mxu0 0.0
        %605 = vmatpush2.msra.mxu0 0.0
        %606 = vmatprep.subr.mxu0 0.0
        %607 = vmatpush2.msra.mxu0 0.0
        %608 = vmatprep.subr.mxu0 0.0
        %609 = vmatpush2.msra.mxu0 0.0
        %610 = vmatprep.subr.mxu0 0.0
        %611 = vmatpush2.msra.mxu0 0.0
        %612 = vmatprep.subr.mxu0 0.0
        %613 = vmatpush2.msra.mxu0 0.0
        %614 = vmatprep.subr.mxu0 0.0
        %615 = vmatpush2.msra.mxu0 0.0
        %616 = vmatprep.subr.mxu0 0.0
        %617 = vmatpush2.msra.mxu0 0.0
        %618 = vmatprep.mubr.f32.mxu0 0.0
        %619 = vmatmul.mubr.f32.gmra.mxu0 %v546
        %v620 = vpop.f32.mrf.mxu0
        %v621 = vadd.f32 1e-05, %v620
        %v622 = vpop.f32.mrf.mxu0
        %623 = vmatprep.mubr.f32.mxu0 0.0
        %624 = vmatmul.mubr.f32.gmra.mxu0 %v547
        %v625 = vpop.f32.mrf.mxu0
        %v626 = vadd.f32 1e-05, %v625
        %v627 = vpop.f32.mrf.mxu0
        %628 = vmatprep.mubr.f32.mxu0 0.0
        %629 = vmatmul.mubr.f32.gmra.mxu0 %v548
        %v630 = vpop.f32.mrf.mxu0
        %v631 = vadd.f32 1e-05, %v630
        %v632 = vpop.f32.mrf.mxu0
        %633 = vmatprep.mubr.f32.mxu0 0.0
        %634 = vmatmul.mubr.f32.gmra.mxu0 %v549
        %v635 = vpop.f32.mrf.mxu0
        %v636 = vadd.f32 1e-05, %v635
        %v637 = vpop.f32.mrf.mxu0
        %638 = vmatprep.mubr.f32.mxu0 0.0
        %639 = vmatmul.mubr.f32.gmra.mxu0 %v550
        %v640 = vpop.f32.mrf.mxu0
        %v641 = vadd.f32 1e-05, %v640
        %v642 = vpop.f32.mrf.mxu0
        %643 = vmatprep.mubr.f32.mxu0 0.0
        %644 = vmatmul.mubr.f32.gmra.mxu0 %v551
        %v645 = vpop.f32.mrf.mxu0
        %v646 = vadd.f32 1e-05, %v645
        %v647 = vpop.f32.mrf.mxu0
        %648 = vmatprep.mubr.f32.mxu0 0.0
        %649 = vmatmul.mubr.f32.gmra.mxu0 %v552
        %v650 = vpop.f32.mrf.mxu0
        %v651 = vadd.f32 1e-05, %v650
        %v652 = vpop.f32.mrf.mxu0
        %653 = vmatprep.mubr.f32.mxu0 0.0
        %654 = vmatmul.mubr.f32.gmra.mxu0 %v553
        %v655 = vpop.f32.mrf.mxu0
        %v656 = vadd.f32 1e-05, %v655
        %v657 = vpop.f32.mrf.mxu0
        %658 = vdwg.mxu0
        %v659 = vrsqrt.pop %v621
        %v660 = vrsqrt.pop %v626
        %v661 = vrsqrt.pop %v631
        %v662 = vrsqrt.pop %v636
        %v663 = vrsqrt.pop %v641
        %v664 = vrsqrt.pop %v646
        %v665 = vrsqrt.pop %v651
        %v666 = vrsqrt.pop %v656
        %v667 = vmul.f32 %v538, %v659
        %v668 = vmul.f32 %v539, %v660
        %v669 = vmul.f32 %v540, %v661
        %v670 = vmul.f32 %v541, %v662
        %v671 = vmul.f32 %v542, %v663
        %v672 = vmul.f32 %v543, %v664
        %v673 = vmul.f32 %v544, %v665
        %v674 = vmul.f32 %v545, %v666
        %v675 = vld [vmem:[%s3] sm:$0x1]
        %v677 = vlaneseq
        %v678 = vshrl.u32 %v677, 7
        %v679 = vsub.s32 0, %v678
        %v680 = vrot.slane %v675, %v679
        %v682 = vmul.f32 %v667, %v680
        %v683 = vmul.f32 %v668, %v680
        %v684 = vmul.f32 %v669, %v680
        %v685 = vmul.f32 %v670, %v680
        %v686 = vmul.f32 %v671, %v680
        %v687 = vmul.f32 %v672, %v680
        %v688 = vmul.f32 %v673, %v680
        %v689 = vmul.f32 %v674, %v680
        %v690 = vld [vmem:[%s4] sm:$0x1]
        %v692 = vlaneseq
        %v693 = vshrl.u32 %v692, 7
        %v694 = vsub.s32 0, %v693
        %v695 = vrot.slane %v690, %v694
        %v697 = vadd.f32 %v682, %v695
        %v698 = vadd.f32 %v683, %v695
        %v699 = vadd.f32 %v684, %v695
        %v700 = vadd.f32 %v685, %v695
        %v701 = vadd.f32 %v686, %v695
        %v702 = vadd.f32 %v687, %v695
        %v703 = vadd.f32 %v688, %v695
        %v704 = vadd.f32 %v689, %v695
        %705 = vst [vmem:[%s262] sm:$0xff] %v697
        %706 = vst [vmem:[%s262 + $0x8] sm:$0xff] %v698
        %707 = vst [vmem:[%s262 + $0x10] sm:$0xff] %v699
        %708 = vst [vmem:[%s262 + $0x18] sm:$0xff] %v700
        %709 = vst [vmem:[%s262 + $0x20] sm:$0xff] %v701
        %710 = vst [vmem:[%s262 + $0x28] sm:$0xff] %v702
        %711 = vst [vmem:[%s262 + $0x30] sm:$0xff] %v703
        %712 = vst [vmem:[%s262 + $0x38] sm:$0xff] %v704
        %s713 = sand.u32 %s157, 1
        %s714 = scalar_lea.sflag [#allocation4], %s713
        %s715 = sand.u32 %s157, 1
        %s716 = smul.addr %s715, 64
        %s717 = scalar_lea.vmem [#allocation5], %s716
        // Predicated region
        $region45: #{tpu_custom_call.1} parent=39 // pred_check
          %p718 = pneg %p167
        $region46: #{tpu_custom_call.1} parent=39 // pred_check_branch
          %720 = sbr.rel (%p718) target = $region48
        $region47: #{tpu_custom_call.1} parent=39 // pred_region
          %s721 = smul.u32 8, %s24
          %s723 = ssub.s32 1024, 1024
          %724 = vsyncadd %s714, %s723
          %s725 = smul.addr %s721, 4
          %s726 = sadd.s32 %s25, %s725
          %s727 = smul.addr %s726, 128
          %s728 = scalar_lea.hbm %s5, %s727
          %s729 = sshll.u32 %s717, 4
          %s730 = int_to_ptr.vmem [resolvable:$true] %s729
          %735 = dma.vmem_to_hbm [thread:$0]  %s730, 1024, %s728, %s714, 128, 512, 8
        $region48: #{tpu_custom_call.1} parent=39 // pred_fallthru
          _
      $region40: #{tpu_custom_call.1} parent=5 // pred_fallthru
        _
      %p736 = scmp.le.s32.totalorder 2, %s15
      // Predicated region
      $region49: #{tpu_custom_call.1} parent=5 // pred_check
        %p737 = pneg %p736
      $region50: #{tpu_custom_call.1} parent=5 // pred_check_branch
        %739 = sbr.rel (%p737) target = $region52
      $region51: #{tpu_custom_call.1} parent=5 // pred_region
        %s740 = ssub.s32 %s15, 2
        // Predicated region
        $region53: #{tpu_custom_call.1} parent=51 // pred_check
          %p741 = pneg %p173
        $region54: #{tpu_custom_call.1} parent=51 // pred_check_branch
          %743 = sbr.rel (%p741) target = $region56
        $region55: #{tpu_custom_call.1} parent=51 // pred_region
          %s744 = sand.u32 %s158, 1
          %s745 = scalar_lea.sflag [#allocation4], %s744
          %s746 = sand.u32 %s158, 1
          %s747 = smul.addr %s746, 64
          %s748 = scalar_lea.vmem [#allocation5], %s747
          %749 = dma.done %s745, 1024
        $region56: #{tpu_custom_call.1} parent=51 // pred_fallthru
          _
      $region52: #{tpu_custom_call.1} parent=5 // pred_fallthru
        _
    $region6: #{tpu_custom_call.1} parent=1 // loop_footer
      %s19 = sadd.s32 1, %s15
    $region7: #{tpu_custom_call.1} parent=1 // loop_footer_branch
      %14 = sbr.rel target = $region3
    $region8: #{tpu_custom_call.1} parent=1 // loop_exit
      _
    %750 = vsyncpa [#allocation3], 1
    %s751 = scalar_lea.sflag [#allocation3], 1
    %752 = vsyncpa %s751, 1
    %753 = vsyncpa [#allocation4], 1
    %s754 = scalar_lea.sflag [#allocation4], 1
    %755 = vsyncpa %s754, 1

</llo_original>
